<compile_context>
chip_gen: v5e
topology: v5e:2x2
jax: 0.10.0
libtpu: 0.0.40
codegen_flags: <defaults>
</compile_context>

<pallas_src>
import jax
import jax.numpy as jnp
from jax.experimental import pallas as pl
from jax.experimental.pallas import tpu as pltpu


def _transition_kernel(x_ref, scale_ref, bias_ref, w_ref, o_ref):
    # x_ref:     (2*TH, Wo, 2*C_in) -- lanes = [even-W-col channels | odd-W-col channels]
    # scale_ref: (1, 1, 2*C_in)     -- folded BN scale (gamma/sqrt(var+eps)), tiled x2
    # bias_ref:  (1, 1, 2*C_in)     -- folded BN bias  (beta - mean*scale), tiled x2
    # w_ref:     (C_in, C_out)      -- 1x1 conv weight with the 0.25 pool scale folded in
    # o_ref:     (TH, Wo, C_out)
    c_in = w_ref.shape[0]

    x = x_ref[...].astype(jnp.float32)
    y = jnp.maximum(x * scale_ref[...] + bias_ref[...], 0.0)      # BN (eval) + ReLU

    # 2x2 average pool (the 1/4 factor lives in w):
    #   W pair: sum the two lane halves.
    p_col = y[:, :, :c_in] + y[:, :, c_in:]                       # (2*TH, Wo, C_in)
    #   H pair: split the leading dim and add (layout-free reshape).
    th2, wo, _ = p_col.shape
    th = th2 // 2
    pr = p_col.reshape(th, 2, wo, c_in)
    p = pr[:, 0] + pr[:, 1]                                       # (TH, Wo, C_in)

    # 1x1 conv (no bias) == channel matmul on the MXU, f32 accumulation.
    p2 = p.reshape(th * wo, c_in).astype(w_ref.dtype)
    z = jnp.dot(p2, w_ref[...], preferred_element_type=jnp.float32)
    o_ref[...] = z.reshape(th, wo, -1).astype(o_ref.dtype)


def _pick_row_tile(Ho, N, row_pair_bytes, target_bytes=2 << 20, min_steps=4):
    """Largest divisor of Ho whose input block fits target_bytes; shrink if the
    grid would be too short to pipeline / shard across TensorCores."""
    divisors = [d for d in range(1, Ho + 1) if Ho % d == 0]
    fitting = [d for d in divisors if d * row_pair_bytes <= target_bytes] or [1]
    th = max(fitting)
    while N * (Ho // th) < min_steps:
        smaller = [d for d in fitting if d < th]
        if not smaller:
            break
        th = max(smaller)
    return th


def transition_forward(x_nchw, gamma, beta, run_mean, run_var, conv_w,
                       eps=1e-5, matmul_dtype=None):
    N, C_in, H, W = x_nchw.shape
    C_out = conv_w.shape[0]
    Ho, Wo = H // 2, W // 2
    # PyTorch AvgPool2d(2,2) silently drops a trailing odd row/column.
    if (H % 2) or (W % 2):
        x_nchw = x_nchw[:, :, : 2 * Ho, : 2 * Wo]

    if matmul_dtype is None:
        matmul_dtype = x_nchw.dtype

    # ---- parameter folding (negligible-size glue) ----
    scale = (gamma.astype(jnp.float32)
             / jnp.sqrt(run_var.astype(jnp.float32) + eps))            # (C_in,)
    bias = beta.astype(jnp.float32) - run_mean.astype(jnp.float32) * scale
    scale2 = jnp.tile(scale, 2).reshape(1, 1, 2 * C_in)                # both W columns
    bias2 = jnp.tile(bias, 2).reshape(1, 1, 2 * C_in)
    # 1x1 conv weight in (C_in, C_out) matmul form; fold 2x2 avg-pool's 1/4 into it.
    w = (jnp.transpose(conv_w.reshape(C_out, C_in), (1, 0)) * 0.25).astype(matmul_dtype)

    # ---- layout: NCHW -> NHWC, then a free reshape folding the W pool pair
    #      into the lane (channel) dimension ----
    x_f = jnp.transpose(x_nchw, (0, 2, 3, 1)).reshape(N, 2 * Ho, Wo, 2 * C_in)

    itemsize = jnp.dtype(x_nchw.dtype).itemsize
    row_pair_bytes = 2 * Wo * 2 * C_in * itemsize       # input bytes per output row
    th = _pick_row_tile(Ho, N, row_pair_bytes)
    grid = (N, Ho // th)

    in_blk = 2 * th * Wo * 2 * C_in * itemsize
    out_blk = th * Wo * C_out * itemsize
    param_blk = 4 * 4 * C_in + C_in * C_out * jnp.dtype(matmul_dtype).itemsize
    # Double-buffered blocks + f32 in-kernel temporaries + headroom,
    # capped well under v7x's 64 MiB physical VMEM.
    vmem_limit = int(min(48 << 20,
                         max(8 << 20,
                             4 * (in_blk + out_blk) + 2 * param_blk + (4 << 20))))

    out_nhwc = pl.pallas_call(
        _transition_kernel,
        out_shape=jax.ShapeDtypeStruct((N, Ho, Wo, C_out), x_nchw.dtype),
        grid=grid,
        in_specs=[
            pl.BlockSpec((pl.Squeezed(), 2 * th, Wo, 2 * C_in),
                         lambda n, i: (n, i, 0, 0)),
            pl.BlockSpec((1, 1, 2 * C_in), lambda n, i: (0, 0, 0)),
            pl.BlockSpec((1, 1, 2 * C_in), lambda n, i: (0, 0, 0)),
            pl.BlockSpec((C_in, C_out), lambda n, i: (0, 0)),
        ],
        out_specs=pl.BlockSpec((pl.Squeezed(), th, Wo, C_out),
                               lambda n, i: (n, i, 0, 0)),
        compiler_params=pltpu.CompilerParams(
            dimension_semantics=("parallel", "parallel"),
            vmem_limit_bytes=vmem_limit),
    )(x_f, scale2, bias2, w)

    return jnp.transpose(out_nhwc, (0, 3, 1, 2))        # back to NCHW (PyTorch semantics)


def _reference(x, gamma, beta, run_mean, run_var, conv_w, eps=1e-5):
    # Pure-JAX reference in the exact PyTorch op order (NCHW).
    xn = (x - run_mean[None, :, None, None]) / jnp.sqrt(
        run_var[None, :, None, None] + eps)
    xn = xn * gamma[None, :, None, None] + beta[None, :, None, None]
    xr = jnp.maximum(xn, 0.0)
    y = jnp.einsum('nchw,oc->nohw', xr, conv_w[:, :, 0, 0])
    N, C, H, W = y.shape
    return y.reshape(N, C, H // 2, 2, W // 2, 2).mean(axis=(3, 5))


if __name__ == "__main__":
    key = jax.random.PRNGKey(0)
    k1, k2, k3, k4, k5, k6 = jax.random.split(key, 6)

    # num_input_features=8, num_output_features=4, spatial 16x16, batch 2
    N, C_in, H, W = 2, 8, 16, 16
    C_out = 4

    x = jax.random.normal(k1, (N, C_in, H, W), jnp.float32)
    gamma = 1.0 + 0.1 * jax.random.normal(k2, (C_in,), jnp.float32)
    beta = 0.1 * jax.random.normal(k3, (C_in,), jnp.float32)
    run_mean = 0.1 * jax.random.normal(k4, (C_in,), jnp.float32)
    run_var = jax.random.uniform(k5, (C_in,), jnp.float32, minval=0.5, maxval=1.5)
    conv_w = 0.1 * jax.random.normal(k6, (C_out, C_in, 1, 1), jnp.float32)

    out = transition_forward(x, gamma, beta, run_mean, run_var, conv_w)
    out = jax.block_until_ready(out)

    ref = _reference(x, gamma, beta, run_mean, run_var, conv_w)
    assert out.shape == (N, C_out, H // 2, W // 2), out.shape
    assert jnp.allclose(out, ref, atol=1e-5, rtol=1e-5), "mismatch vs reference"
    print("KERNEL_OK")
</pallas_src>

<mosaic_0001>
module attributes {stable_mosaic.version = 11 : i64} {
  func.func @_transition_kernel(%arg0: i32, %arg1: i32, %arg2: memref<1x8x8x16xf32, #tpu.memory_space<vmem>>, %arg3: memref<1x1x16xf32, #tpu.memory_space<vmem>>, %arg4: memref<1x1x16xf32, #tpu.memory_space<vmem>>, %arg5: memref<8x4xf32, #tpu.memory_space<vmem>>, %arg6: memref<1x4x8x4xf32, #tpu.memory_space<vmem>>) attributes {dimension_semantics = [#tpu.dimension_semantics<parallel>, #tpu.dimension_semantics<parallel>], iteration_bounds = array<i64: 2, 2>, scalar_prefetch = 0 : i64, scratch_operands = 0 : i64, tpu.core_type = #tpu.core_type<tc>, window_params = [{transform_indices = @transform_0, window_bounds = array<i64: 1, 8, 8, 16>}, {pipeline_mode = #tpu.pipeline_mode<synchronous>, transform_indices = @transform_1, window_bounds = array<i64: 1, 1, 16>}, {pipeline_mode = #tpu.pipeline_mode<synchronous>, transform_indices = @transform_2, window_bounds = array<i64: 1, 1, 16>}, {pipeline_mode = #tpu.pipeline_mode<synchronous>, transform_indices = @transform_3, window_bounds = array<i64: 8, 4>}, {transform_indices = @transform_4, window_bounds = array<i64: 1, 4, 8, 4>}]} {
    %c0 = arith.constant 0 : index
    %c0_0 = arith.constant 0 : index
    %c0_1 = arith.constant 0 : index
    %c0_2 = arith.constant 0 : index
    %0 = vector.load %arg2[%c0, %c0_0, %c0_1, %c0_2] : memref<1x8x8x16xf32, #tpu.memory_space<vmem>>, vector<1x8x8x16xf32>
    %1 = vector.shape_cast %0 : vector<1x8x8x16xf32> to vector<8x8x16xf32>
    %c0_3 = arith.constant 0 : index
    %c0_4 = arith.constant 0 : index
    %c0_5 = arith.constant 0 : index
    %2 = vector.load %arg3[%c0_3, %c0_4, %c0_5] : memref<1x1x16xf32, #tpu.memory_space<vmem>>, vector<1x1x16xf32>
    %3 = vector.broadcast %2 : vector<1x1x16xf32> to vector<8x8x16xf32>
    %4 = arith.mulf %1, %3 : vector<8x8x16xf32>
    %c0_6 = arith.constant 0 : index
    %c0_7 = arith.constant 0 : index
    %c0_8 = arith.constant 0 : index
    %5 = vector.load %arg4[%c0_6, %c0_7, %c0_8] : memref<1x1x16xf32, #tpu.memory_space<vmem>>, vector<1x1x16xf32>
    %6 = vector.broadcast %5 : vector<1x1x16xf32> to vector<8x8x16xf32>
    %7 = arith.addf %4, %6 : vector<8x8x16xf32>
    %cst = arith.constant 0.000000e+00 : f32
    %8 = vector.broadcast %cst : f32 to vector<8x8x16xf32>
    %9 = arith.maximumf %7, %8 : vector<8x8x16xf32>
    %10 = vector.extract_strided_slice %9 {offsets = [0, 0, 0], sizes = [8, 8, 8], strides = [1, 1, 1]} : vector<8x8x16xf32> to vector<8x8x8xf32>
    %11 = vector.extract_strided_slice %9 {offsets = [0, 0, 8], sizes = [8, 8, 8], strides = [1, 1, 1]} : vector<8x8x16xf32> to vector<8x8x8xf32>
    %12 = arith.addf %10, %11 : vector<8x8x8xf32>
    %13 = vector.shape_cast %12 : vector<8x8x8xf32> to vector<4x2x8x8xf32>
    %14 = vector.extract_strided_slice %13 {offsets = [0, 0, 0, 0], sizes = [4, 1, 8, 8], strides = [1, 1, 1, 1]} : vector<4x2x8x8xf32> to vector<4x1x8x8xf32>
    %15 = vector.shape_cast %14 : vector<4x1x8x8xf32> to vector<4x8x8xf32>
    %16 = vector.extract_strided_slice %13 {offsets = [0, 1, 0, 0], sizes = [4, 1, 8, 8], strides = [1, 1, 1, 1]} : vector<4x2x8x8xf32> to vector<4x1x8x8xf32>
    %17 = vector.shape_cast %16 : vector<4x1x8x8xf32> to vector<4x8x8xf32>
    %18 = arith.addf %15, %17 : vector<4x8x8xf32>
    %19 = vector.shape_cast %18 : vector<4x8x8xf32> to vector<32x8xf32>
    %c0_9 = arith.constant 0 : index
    %c0_10 = arith.constant 0 : index
    %20 = vector.load %arg5[%c0_9, %c0_10] : memref<8x4xf32, #tpu.memory_space<vmem>>, vector<8x4xf32>
    %cst_11 = arith.constant dense<0.000000e+00> : vector<32x4xf32>
    %21 = tpu.matmul %19, %20, %cst_11 {dimension_numbers = #tpu.dot_dimension_numbers<[1], [0], [0], [1], [0, 0, 1, 1], [], []>} : vector<32x8xf32>, vector<8x4xf32>, vector<32x4xf32> -> vector<32x4xf32>
    %22 = vector.shape_cast %21 : vector<32x4xf32> to vector<4x8x4xf32>
    %c0_12 = arith.constant 0 : index
    %c0_13 = arith.constant 0 : index
    %c0_14 = arith.constant 0 : index
    %c0_15 = arith.constant 0 : index
    %23 = vector.load %arg6[%c0_12, %c0_13, %c0_14, %c0_15] : memref<1x4x8x4xf32, #tpu.memory_space<vmem>>, vector<1x4x8x4xf32>
    %24 = vector.shape_cast %23 : vector<1x4x8x4xf32> to vector<4x8x4xf32>
    %25 = vector.shape_cast %22 : vector<4x8x4xf32> to vector<1x4x8x4xf32>
    tpu.vector_store %arg6[%c0_12, %c0_13, %c0_14, %c0_15], %25 {strides = array<i32>} : memref<1x4x8x4xf32, #tpu.memory_space<vmem>>, vector<1x4x8x4xf32>,
    return
  }
  func.func @transform_0(%arg0: i32, %arg1: i32) -> (i32, i32, i32, i32) {
    %c0_i32 = arith.constant 0 : i32
    %c0_i32_0 = arith.constant 0 : i32
    %c0_i32_1 = arith.constant 0 : i32
    return %arg0, %arg1, %c0_i32, %c0_i32_0 : i32, i32, i32, i32
  }
  func.func @transform_1(%arg0: i32, %arg1: i32) -> (i32, i32, i32) {
    %c0_i32 = arith.constant 0 : i32
    %c0_i32_0 = arith.constant 0 : i32
    %c0_i32_1 = arith.constant 0 : i32
    %c0_i32_2 = arith.constant 0 : i32
    return %c0_i32, %c0_i32_0, %c0_i32_1 : i32, i32, i32
  }
  func.func @transform_2(%arg0: i32, %arg1: i32) -> (i32, i32, i32) {
    %c0_i32 = arith.constant 0 : i32
    %c0_i32_0 = arith.constant 0 : i32
    %c0_i32_1 = arith.constant 0 : i32
    %c0_i32_2 = arith.constant 0 : i32
    return %c0_i32, %c0_i32_0, %c0_i32_1 : i32, i32, i32
  }
  func.func @transform_3(%arg0: i32, %arg1: i32) -> (i32, i32) {
    %c0_i32 = arith.constant 0 : i32
    %c0_i32_0 = arith.constant 0 : i32
    %c0_i32_1 = arith.constant 0 : i32
    return %c0_i32, %c0_i32_0 : i32, i32
  }
  func.func @transform_4(%arg0: i32, %arg1: i32) -> (i32, i32, i32, i32) {
    %c0_i32 = arith.constant 0 : i32
    %c0_i32_0 = arith.constant 0 : i32
    %c0_i32_1 = arith.constant 0 : i32
    return %arg0, %arg1, %c0_i32, %c0_i32_0 : i32, i32, i32, i32
  }
}

</mosaic_0001>

<llo_original>
// kernel: tpu_custom_call.1
$region0: #{tpu_custom_call.1}
  #allocation0 [shape = 'u32[]', space=smem, size = 0x4, offset = 0x4, fixed_abs, tag = 'smem constant byte address 0x4 - core index']
  #allocation1 [shape = 'u32[72,128]{1,0:T(1,128)}', space=vmem, size = 0x9000, scoped, tag = 'internal scratch']
  %s0 = inlined_call_operand.hbm [shape: f32[2,16,8,16], index: 0, kind: input, shape index: {}]
  %s1 = inlined_call_operand.vmem [shape: f32[1,1,16], index: 1, kind: input, shape index: {}]
  %s2 = inlined_call_operand.vmem [shape: f32[1,1,16], index: 2, kind: input, shape index: {}]
  %s3 = inlined_call_operand.vmem [shape: f32[8,4], index: 3, kind: input, shape index: {}]
  %s4 = inlined_call_operand.vmem [shape: f32[2,8,8,4], index: 4, kind: output, shape index: {}]
  %s5 = sld [smem:[#allocation0]]
  $region53: #{tpu_custom_call.1} parent=0
    _
  %s7 = ssub.s32 1, %s5
  %s8 = scalar_select 0, %s7, %s5
  $region1: #{tpu_custom_call.1} parent=0
    #allocation2 [shape = 'u8[65536]{0}', space=vmem, size = 0x10000, scoped, tag = 'input window, operand 0']
    #allocation3 [shape = 's32[2]{0}', space=sflag, size = 0x8, scoped, tag = 'scoped memory for tpu_custom_call.1']
    %9 = vsyncpa [#allocation3], 0
    %s10 = scalar_lea.sflag [#allocation3], 1
    %11 = vsyncpa %s10, 0
    loop: start=0, step=1, limit=6
    $region2: #{tpu_custom_call.1} parent=1 // loop_pre_header
      _
    $region3: #{tpu_custom_call.1} parent=1 // loop_header
      %s13 = sphi 0, %s17
      %p14 = scmp.ge.s32.totalorder %s13, 6
      %s20 = sphi 0, %s32
      %s21 = sphi 0, %s28
      %s22 = sphi 0, %s20
      %s23 = sphi 0, %s21
      %s24 = sphi 0, %s22
      %s25 = sphi 0, %s23
      %s37 = sphi 0, %s39
      %s40 = sphi 0, %s37
      %s41 = sphi 0, %s40
      %s57 = sphi 0, %s41
      %s61 = sphi 0, %s61
      %s63 = sphi 0, %s61
      %s64 = sphi 0, %s63
      %s78 = sphi 0, %s64
      %s82 = sphi 0, %s82
      %s84 = sphi 0, %s82
      %s85 = sphi 0, %s84
      %s99 = sphi 0, %s85
      %s103 = sphi 0, %s103
      %s105 = sphi 0, %s103
      %s106 = sphi 0, %s105
      %s120 = sphi 0, %s106
      %s128 = sphi 0, %s130
      %s131 = sphi 0, %s128
      %s132 = sphi 0, %s131
      %s148 = sphi 0, %s132
    $region4: #{tpu_custom_call.1} parent=1 // loop_header_branch
      %16 = sbr.rel (%p14) target = $region8
    $region5: #{tpu_custom_call.1} parent=1 // loop_body
      %s18 = ssub.s32 %s13, 1
      %s19 = ssub.s32 %s13, 2
      %s26 = sadd.s32 1, %s21
      %p27 = scmp.ge.s32.totalorder %s26, 2
      %s28 = scalar_select %p27, 0, %s26
      %s29 = sadd.s32 1, %s20
      %s30 = scalar_select %p27, %s29, %s20
      %p31 = scmp.ge.s32.totalorder %s30, 2
      %s32 = scalar_select %p31, 0, %s30
      %s33 = ssub.s32 %s20, %s32
      %s34 = ssub.s32 %s21, %s28
      %s35 = sor.u32 %s33, %s34
      %p36 = scmp.eq.s32.totalorder %s35, 0
      %s38 = sadd.s32 %s37, 1
      %s39 = scalar_select %p36, %s37, %s38
      %p42 = pneg %p36
      %p43 = scmp.eq.s32.totalorder %s13, 3
      %p44 = por %p42, %p43
      %p45 = scmp.ne.s32.totalorder %s37, %s40
      %p46 = scmp.eq.s32.totalorder %s13, 0
      %p47 = por %p45, %p46
      %p48 = scmp.ne.s32.totalorder %s37, %s40
      %p49 = scmp.eq.s32.totalorder %s18, 3
      %p50 = por %p48, %p49
      %p51 = scmp.ne.s32.totalorder %s40, %s41
      %p52 = scmp.eq.s32.totalorder %s18, 0
      %p53 = por %p51, %p52
      %p54 = scmp.ne.s32.totalorder %s40, %s41
      %p55 = scmp.eq.s32.totalorder %s19, 3
      %p56 = por %p54, %p55
      %p58 = scmp.ne.s32.totalorder %s41, %s57
      %p59 = scmp.eq.s32.totalorder %s19, 0
      %p60 = por %p58, %p59
      %s62 = sadd.s32 %s61, 1
      %p65 = scmp.eq.s32.totalorder %s13, 3
      %p66 = scmp.ne.s32.totalorder %s61, %s63
      %p67 = scmp.eq.s32.totalorder %s13, 0
      %p68 = por %p66, %p67
      %p69 = scmp.ne.s32.totalorder %s61, %s63
      %p70 = scmp.eq.s32.totalorder %s18, 3
      %p71 = por %p69, %p70
      %p72 = scmp.ne.s32.totalorder %s63, %s64
      %p73 = scmp.eq.s32.totalorder %s18, 0
      %p74 = por %p72, %p73
      %p75 = scmp.ne.s32.totalorder %s63, %s64
      %p76 = scmp.eq.s32.totalorder %s19, 3
      %p77 = por %p75, %p76
      %p79 = scmp.ne.s32.totalorder %s64, %s78
      %p80 = scmp.eq.s32.totalorder %s19, 0
      %p81 = por %p79, %p80
      %s83 = sadd.s32 %s82, 1
      %p86 = scmp.eq.s32.totalorder %s13, 3
      %p87 = scmp.ne.s32.totalorder %s82, %s84
      %p88 = scmp.eq.s32.totalorder %s13, 0
      %p89 = por %p87, %p88
      %p90 = scmp.ne.s32.totalorder %s82, %s84
      %p91 = scmp.eq.s32.totalorder %s18, 3
      %p92 = por %p90, %p91
      %p93 = scmp.ne.s32.totalorder %s84, %s85
      %p94 = scmp.eq.s32.totalorder %s18, 0
      %p95 = por %p93, %p94
      %p96 = scmp.ne.s32.totalorder %s84, %s85
      %p97 = scmp.eq.s32.totalorder %s19, 3
      %p98 = por %p96, %p97
      %p100 = scmp.ne.s32.totalorder %s85, %s99
      %p101 = scmp.eq.s32.totalorder %s19, 0
      %p102 = por %p100, %p101
      %s104 = sadd.s32 %s103, 1
      %p107 = scmp.eq.s32.totalorder %s13, 3
      %p108 = scmp.ne.s32.totalorder %s103, %s105
      %p109 = scmp.eq.s32.totalorder %s13, 0
      %p110 = por %p108, %p109
      %p111 = scmp.ne.s32.totalorder %s103, %s105
      %p112 = scmp.eq.s32.totalorder %s18, 3
      %p113 = por %p111, %p112
      %p114 = scmp.ne.s32.totalorder %s105, %s106
      %p115 = scmp.eq.s32.totalorder %s18, 0
      %p116 = por %p114, %p115
      %p117 = scmp.ne.s32.totalorder %s105, %s106
      %p118 = scmp.eq.s32.totalorder %s19, 3
      %p119 = por %p117, %p118
      %p121 = scmp.ne.s32.totalorder %s106, %s120
      %p122 = scmp.eq.s32.totalorder %s19, 0
      %p123 = por %p121, %p122
      %s124 = ssub.s32 %s20, %s32
      %s125 = ssub.s32 %s21, %s28
      %s126 = sor.u32 %s124, %s125
      %p127 = scmp.eq.s32.totalorder %s126, 0
      %s129 = sadd.s32 %s128, 1
      %s130 = scalar_select %p127, %s128, %s129
      %p133 = pneg %p127
      %p134 = scmp.eq.s32.totalorder %s13, 3
      %p135 = por %p133, %p134
      %p136 = scmp.ne.s32.totalorder %s128, %s131
      %p137 = scmp.eq.s32.totalorder %s13, 0
      %p138 = por %p136, %p137
      %p139 = scmp.ne.s32.totalorder %s128, %s131
      %p140 = scmp.eq.s32.totalorder %s18, 3
      %p141 = por %p139, %p140
      %p142 = scmp.ne.s32.totalorder %s131, %s132
      %p143 = scmp.eq.s32.totalorder %s18, 0
      %p144 = por %p142, %p143
      %p145 = scmp.ne.s32.totalorder %s131, %s132
      %p146 = scmp.eq.s32.totalorder %s19, 3
      %p147 = por %p145, %p146
      %p149 = scmp.ne.s32.totalorder %s132, %s148
      %p150 = scmp.eq.s32.totalorder %s19, 0
      %p151 = por %p149, %p150
      %p152 = scmp.le.s32.totalorder 1, %s13
      %p153 = scmp.lt.s32.totalorder %s13, 5
      %p154 = pnand %p152, %p153
      %p155 = pneg %p154
      // Predicated region
      $region9: #{tpu_custom_call.1} parent=5 // pred_check
        _
      $region10: #{tpu_custom_call.1} parent=5 // pred_check_branch
        %157 = sbr.rel (%p154) target = $region12
      $region11: #{tpu_custom_call.1} parent=5 // pred_region
        %s158 = ssub.s32 %s13, 1
        // Predicated region
        $region13: #{tpu_custom_call.1} parent=11 // pred_check
          %p159 = pneg %p74
        $region14: #{tpu_custom_call.1} parent=11 // pred_check_branch
          %161 = sbr.rel (%p159) target = $region16
        $region15: #{tpu_custom_call.1} parent=11 // pred_region
          _
        $region16: #{tpu_custom_call.1} parent=11 // pred_fallthru
          _
        // Predicated region
        $region17: #{tpu_custom_call.1} parent=11 // pred_check
          %p162 = pneg %p95
        $region18: #{tpu_custom_call.1} parent=11 // pred_check_branch
          %164 = sbr.rel (%p162) target = $region20
        $region19: #{tpu_custom_call.1} parent=11 // pred_region
          _
        $region20: #{tpu_custom_call.1} parent=11 // pred_fallthru
          _
        // Predicated region
        $region21: #{tpu_custom_call.1} parent=11 // pred_check
          %p165 = pneg %p116
        $region22: #{tpu_custom_call.1} parent=11 // pred_check_branch
          %167 = sbr.rel (%p165) target = $region24
        $region23: #{tpu_custom_call.1} parent=11 // pred_region
          _
        $region24: #{tpu_custom_call.1} parent=11 // pred_fallthru
          _
      $region12: #{tpu_custom_call.1} parent=5 // pred_fallthru
        _
      %p168 = scmp.lt.s32.totalorder %s13, 4
      // Predicated region
      $region25: #{tpu_custom_call.1} parent=5 // pred_check
        %p169 = pneg %p168
      $region26: #{tpu_custom_call.1} parent=5 // pred_check_branch
        %171 = sbr.rel (%p169) target = $region28
      $region27: #{tpu_custom_call.1} parent=5 // pred_region
        // Predicated region
        $region29: #{tpu_custom_call.1} parent=27 // pred_check
          %p172 = pneg %p47
        $region30: #{tpu_custom_call.1} parent=27 // pred_check_branch
          %174 = sbr.rel (%p172) target = $region32
        $region31: #{tpu_custom_call.1} parent=27 // pred_region
          %s175 = sand.u32 %s37, 1
          %s176 = scalar_lea.sflag [#allocation3], %s175
          %s177 = sand.u32 %s37, 1
          %s178 = smul.addr %s177, 64
          %s179 = scalar_lea.vmem [#allocation2], %s178
          %s180 = smul.u32 8, %s21
          %182 = vsyncadd %s176, 0
          %s183 = smul.addr %s20, 16
          %s184 = sadd.s32 %s180, %s183
          %s185 = smul.addr %s184, 8
          %s186 = scalar_lea.hbm %s0, %s185
          %s187 = sshll.u32 %s186, 4
          %s188 = int_to_ptr.hbm [resolvable:$true] %s187
          %s189 = sshll.u32 %s179, 4
          %s190 = int_to_ptr.vmem [resolvable:$true] %s189
          %195 = dma.hbm_to_vmem [thread:$0]  %s188, 1024, %s190, %s176, 128, 128, 8
        $region32: #{tpu_custom_call.1} parent=27 // pred_fallthru
          _
      $region28: #{tpu_custom_call.1} parent=5 // pred_fallthru
        _
      %p196 = scmp.le.s32.totalorder 1, %s13
      %p197 = scmp.lt.s32.totalorder %s13, 5
      %p198 = pnand %p196, %p197
      %p199 = pneg %p198
      // Predicated region
      $region33: #{tpu_custom_call.1} parent=5 // pred_check
        _
      $region34: #{tpu_custom_call.1} parent=5 // pred_check_branch
        %201 = sbr.rel (%p198) target = $region36
      $region35: #{tpu_custom_call.1} parent=5 // pred_region
        %s202 = ssub.s32 %s13, 1
        %s203 = sand.u32 %s40, 1
        %s204 = scalar_lea.sflag [#allocation3], %s203
        %s205 = sand.u32 %s40, 1
        %s206 = smul.addr %s205, 64
        %s207 = scalar_lea.vmem [#allocation2], %s206
        // Predicated region
        $region37: #{tpu_custom_call.1} parent=35 // pred_check
          %p208 = pneg %p53
        $region38: #{tpu_custom_call.1} parent=35 // pred_check_branch
          %210 = sbr.rel (%p208) target = $region40
        $region39: #{tpu_custom_call.1} parent=35 // pred_region
          %212 = dma.done %s204, 1024
        $region40: #{tpu_custom_call.1} parent=35 // pred_fallthru
          _
        %s213 = sand.u32 %s40, 1
        %s214 = scalar_lea.sflag [#allocation3], %s213
        %s215 = sand.u32 %s40, 1
        %s216 = smul.addr %s215, 64
        %s217 = scalar_lea.vmem [#allocation2], %s216
        %p218 = pneg %p53
        %p219 = pneg %p50
        %p220 = pneg %p74
        %p221 = pneg %p71
        %p222 = pneg %p95
        %p223 = pneg %p92
        %p224 = pneg %p116
        %p225 = pneg %p113
        %p226 = pneg %p144
        %p227 = pneg %p141
        %s228 = smul.u32 4, %s23
        %p229 = scmp.lt.s32.totalorder %s22, 1
        %s230 = scalar_select %p229, %s22, 1
        %p231 = scmp.lt.s32.totalorder %s228, 7
        %s232 = scalar_select %p231, %s228, 7
        %s233 = smul.addr %s230, 8
        %s234 = sadd.s32 %s232, %s233
        %s235 = smul.addr %s234, 8
        %s236 = scalar_lea.vmem %s4, %s235
        %s237 = smul.u32 8, %s23
        %s238 = smul.u32 4, %s23
        %p239 = scmp.lt.s32.totalorder %s22, 1
        %s240 = scalar_select %p239, %s22, 1
        %p241 = scmp.lt.s32.totalorder %s238, 7
        %s242 = scalar_select %p241, %s238, 7
        %s243 = smul.addr %s240, 8
        %s244 = sadd.s32 %s242, %s243
        %s245 = smul.addr %s244, 8
        %s246 = scalar_lea.vmem %s4, %s245
        %s247 = smul.u32 4, %s23
        %v248 = vld [vmem:[%s207] sm:$0xff]
        %v249 = vld [vmem:[%s207 + $0x8] sm:$0xff]
        %v250 = vld [vmem:[%s207 + $0x10] sm:$0xff]
        %v251 = vld [vmem:[%s207 + $0x18] sm:$0xff]
        %v252 = vld [vmem:[%s207 + $0x20] sm:$0xff]
        %v253 = vld [vmem:[%s207 + $0x28] sm:$0xff]
        %v254 = vld [vmem:[%s207 + $0x30] sm:$0xff]
        %v255 = vld [vmem:[%s207 + $0x38] sm:$0xff]
        %v256 = vld [vmem:[%s1] sm:$0x1]
        %v258 = vperm.slane %v256, 0
        %v260 = vmul.f32 %v248, %v258
        %v261 = vmul.f32 %v249, %v258
        %v262 = vmul.f32 %v250, %v258
        %v263 = vmul.f32 %v251, %v258
        %v264 = vmul.f32 %v252, %v258
        %v265 = vmul.f32 %v253, %v258
        %v266 = vmul.f32 %v254, %v258
        %v267 = vmul.f32 %v255, %v258
        %v268 = vld [vmem:[%s2] sm:$0x1]
        %v270 = vperm.slane %v268, 0
        %v272 = vadd.f32 %v260, %v270
        %v273 = vadd.f32 %v261, %v270
        %v274 = vadd.f32 %v262, %v270
        %v275 = vadd.f32 %v263, %v270
        %v276 = vadd.f32 %v264, %v270
        %v277 = vadd.f32 %v265, %v270
        %v278 = vadd.f32 %v266, %v270
        %v279 = vadd.f32 %v267, %v270
        %v280 = vmax.f32 %v272, 0.0
        %v281 = vmax.f32 %v273, 0.0
        %v282 = vmax.f32 %v274, 0.0
        %v283 = vmax.f32 %v275, 0.0
        %v284 = vmax.f32 %v276, 0.0
        %v285 = vmax.f32 %v277, 0.0
        %v286 = vmax.f32 %v278, 0.0
        %v287 = vmax.f32 %v279, 0.0
        %296 = vrot.lane.b32.xlu0 %v280, 120
        %v297 = vpop.permute.xlu0 %296
        %298 = vrot.lane.b32.xlu0 %v281, 120
        %v299 = vpop.permute.xlu0 %298
        %300 = vrot.lane.b32.xlu0 %v282, 120
        %v301 = vpop.permute.xlu0 %300
        %302 = vrot.lane.b32.xlu0 %v283, 120
        %v303 = vpop.permute.xlu0 %302
        %304 = vrot.lane.b32.xlu0 %v284, 120
        %v305 = vpop.permute.xlu0 %304
        %306 = vrot.lane.b32.xlu0 %v285, 120
        %v307 = vpop.permute.xlu0 %306
        %308 = vrot.lane.b32.xlu0 %v286, 120
        %v309 = vpop.permute.xlu0 %308
        %310 = vrot.lane.b32.xlu0 %v287, 120
        %v311 = vpop.permute.xlu0 %310
        %v320 = vadd.f32 %v280, %v297
        %v321 = vadd.f32 %v281, %v299
        %v322 = vadd.f32 %v282, %v301
        %v323 = vadd.f32 %v283, %v303
        %v324 = vadd.f32 %v284, %v305
        %v325 = vadd.f32 %v285, %v307
        %v326 = vadd.f32 %v286, %v309
        %v327 = vadd.f32 %v287, %v311
        %v328 = vadd.f32 %v320, %v321
        %v329 = vadd.f32 %v322, %v323
        %v330 = vadd.f32 %v324, %v325
        %v331 = vadd.f32 %v326, %v327
        %v332 = vld [vmem:[%s3] sm:$0xff]
        %vm333 = vcmask 64512
        %v335 = vsel %vm333, %v328, 0
        %v338 = vsel %vm333, %v329, 0
        %v341 = vsel %vm333, %v330, 0
        %v344 = vsel %vm333, %v331, 0
        %346 = vmatpush.msra.mxu0 0.0
        %347 = vmatpush.msra.mxu0 0.0
        %348 = vmatpush.msra.mxu0 0.0
        %349 = vmatpush.msra.mxu0 0.0
        %350 = vmatpush.msra.mxu0 0.0
        %351 = vmatpush.msra.mxu0 0.0
        %352 = vmatpush.msra.mxu0 0.0
        %353 = vmatpush.msra.mxu0 0.0
        %354 = vmatpush.msra.mxu0 0.0
        %355 = vmatpush.msra.mxu0 0.0
        %356 = vmatpush.msra.mxu0 0.0
        %357 = vmatpush.msra.mxu0 0.0
        %358 = vmatpush.msra.mxu0 0.0
        %359 = vmatpush.msra.mxu0 0.0
        %360 = vmatpush.msra.mxu0 0.0
        %361 = vmatpush.msra.mxu0 %v332
        %362 = vmatmul.f32.gmra.mxu0 %v335
        %v363 = vpop.f32.mrf.mxu0
        %v364 = vadd.f32 0.0, %v363
        %365 = vmatmul.f32.gmra.mxu0 %v338
        %v366 = vpop.f32.mrf.mxu0
        %v367 = vadd.f32 0.0, %v366
        %368 = vmatmul.f32.gmra.mxu0 %v341
        %v369 = vpop.f32.mrf.mxu0
        %v370 = vadd.f32 0.0, %v369
        %371 = vmatmul.f32.gmra.mxu0 %v344
        %v372 = vpop.f32.mrf.mxu0
        %v373 = vadd.f32 0.0, %v372
        %374 = vdwg.mxu0
        %vm375 = vcmask 31744
        %376 = vst.msk [vmem:[%s246] sm:$0xff] %vm375, %v364
        %377 = vst.msk [vmem:[%s246 + $0x8] sm:$0xff] %vm375, %v367
        %378 = vst.msk [vmem:[%s246 + $0x10] sm:$0xff] %vm375, %v370
        %379 = vst.msk [vmem:[%s246 + $0x18] sm:$0xff] %vm375, %v373
        %s380 = smul.u32 4, %s23
        %p381 = scmp.lt.s32.totalorder %s22, 1
        %s382 = scalar_select %p381, %s22, 1
        %p383 = scmp.lt.s32.totalorder %s380, 7
        %s384 = scalar_select %p383, %s380, 7
        %s385 = smul.addr %s382, 8
        %s386 = sadd.s32 %s384, %s385
        %s387 = smul.addr %s386, 8
        %s388 = scalar_lea.vmem %s4, %s387
        // Predicated region
        $region41: #{tpu_custom_call.1} parent=35 // pred_check
          %p389 = pneg %p141
        $region42: #{tpu_custom_call.1} parent=35 // pred_check_branch
          %391 = sbr.rel (%p389) target = $region44
        $region43: #{tpu_custom_call.1} parent=35 // pred_region
          %s392 = smul.u32 4, %s23
        $region44: #{tpu_custom_call.1} parent=35 // pred_fallthru
          _
      $region36: #{tpu_custom_call.1} parent=5 // pred_fallthru
        _
      %p393 = scmp.le.s32.totalorder 2, %s13
      // Predicated region
      $region45: #{tpu_custom_call.1} parent=5 // pred_check
        %p394 = pneg %p393
      $region46: #{tpu_custom_call.1} parent=5 // pred_check_branch
        %396 = sbr.rel (%p394) target = $region48
      $region47: #{tpu_custom_call.1} parent=5 // pred_region
        %s397 = ssub.s32 %s13, 2
        // Predicated region
        $region49: #{tpu_custom_call.1} parent=47 // pred_check
          %p398 = pneg %p147
        $region50: #{tpu_custom_call.1} parent=47 // pred_check_branch
          %400 = sbr.rel (%p398) target = $region52
        $region51: #{tpu_custom_call.1} parent=47 // pred_region
          %s401 = smul.u32 4, %s25
          %p402 = scmp.lt.s32.totalorder %s24, 1
          %s403 = scalar_select %p402, %s24, 1
          %p404 = scmp.lt.s32.totalorder %s401, 7
          %s405 = scalar_select %p404, %s401, 7
          %s406 = smul.addr %s403, 8
          %s407 = sadd.s32 %s405, %s406
          %s408 = smul.addr %s407, 8
          %s409 = scalar_lea.vmem %s4, %s408
        $region52: #{tpu_custom_call.1} parent=47 // pred_fallthru
          _
      $region48: #{tpu_custom_call.1} parent=5 // pred_fallthru
        _
    $region6: #{tpu_custom_call.1} parent=1 // loop_footer
      %s17 = sadd.s32 1, %s13
    $region7: #{tpu_custom_call.1} parent=1 // loop_footer_branch
      %12 = sbr.rel target = $region3
    $region8: #{tpu_custom_call.1} parent=1 // loop_exit
      _
    %410 = vsyncpa [#allocation3], 1
    %s411 = scalar_lea.sflag [#allocation3], 1
    %412 = vsyncpa %s411, 1

</llo_original>
